<compile_context>
chip_gen: v7x
topology: tpu7x:2x2x1
jax: 0.10.0
libtpu: 0.0.40
codegen_flags: <defaults>
</compile_context>

<pallas_src>
import functools

import jax
import jax.numpy as jnp
import numpy as np
from jax.experimental import pallas as pl
from jax.experimental.pallas import tpu as pltpu

_EPS = 1e-5      # GroupNorm default eps
_LANE = 128
_SUBLANE = 8


def _softplus(x):
    # numerically-stable log(1 + exp(x))
    return jnp.maximum(x, 0.0) + jnp.log1p(jnp.exp(-jnp.abs(x)))


def _groupnorm1(h, gamma, beta):
    # nn.GroupNorm(1, C) on a (., C, 1, 1) tensor == per-sample layer norm over C
    mu = jnp.mean(h, axis=-1, keepdims=True)
    var = jnp.mean((h - mu) ** 2, axis=-1, keepdims=True)
    return (h - mu) * jax.lax.rsqrt(var + _EPS) * gamma + beta


def _vmem_capacity_bytes():
    """Physical VMEM per core (128 MiB v5e/v6e, 64 MiB v7x); conservative fallback."""
    try:
        info = pltpu.get_tpu_info()
        cap = int(getattr(info, "vmem_capacity_bytes", 0) or 0)
        if cap > 0:
            return cap
    except Exception:
        pass
    return 64 * 1024 * 1024


def _choose_divisor_tile(extent, quantum, target):
    """Largest multiple of `quantum` dividing `extent` that is <= `target`.
    Falls back to the full extent when extent is small or not quantum-aligned."""
    if extent <= target or extent % quantum != 0:
        return extent
    t = max(quantum, (target // quantum) * quantum)
    while t > quantum:
        if extent % t == 0:
            return t
        t -= quantum
    return quantum


# ---------------------------------------------------------------------------
# Pass 1: global-average-pool of m -> y (B, Cin) f32.
# Grid (channel-tile [parallel], spatial-tile [arbitrary]); lane-wide VPU
# accumulation in a (B, tile_c, 128) f32 scratch; one XLU reduce per channel tile.
# ---------------------------------------------------------------------------
def _pool_kernel(m_ref, y_ref, acc_ref, *, inv_hwm):
    si = pl.program_id(1)
    tile_s = m_ref.shape[-1]

    if tile_s % _LANE != 0:
        # Only generated when the spatial extent is a single full-width block
        # (grid_s == 1): one direct cross-lane reduce, no accumulator needed.
        y_ref[...] = jnp.sum(m_ref[...].astype(jnp.float32), axis=-1) * inv_hwm
        return

    @pl.when(si == 0)
    def _init():
        acc_ref[...] = jnp.zeros_like(acc_ref)

    # lane-wide VPU adds (no per-step cross-lane reduce); in-kernel f32 cast
    for c in range(tile_s // _LANE):
        acc_ref[...] += m_ref[:, :, c * _LANE:(c + 1) * _LANE].astype(jnp.float32)

    @pl.when(si == pl.num_programs(1) - 1)
    def _finalize():
        y_ref[...] = jnp.sum(acc_ref[...], axis=-1) * inv_hwm


# ---------------------------------------------------------------------------
# Pass 2: SE attention + ADFC (fused expert matmul) + 1x1 conv + sigmoid gate.
# Single-program call on the tiny pooled descriptor; all matmuls batched M=B.
# ---------------------------------------------------------------------------
def _gate_kernel(y_ref, w1t_ref, g1_ref, b1_ref, w2t_ref, g2_ref, b2_ref,
                 adfc_wt_ref, adfc_b_ref, w3t_ref, b3_ref, gate_ref,
                 *, n_experts, oh):
    y = y_ref[...]                                                        # (B, Cin) f32

    # ---- SqueezeAndExcitation attention ----
    h1 = jnp.dot(y, w1t_ref[...], preferred_element_type=jnp.float32)    # (B, Cr)
    h1 = _groupnorm1(h1, g1_ref[...], b1_ref[...])
    h1 = h1 * jnp.tanh(_softplus(h1))                                     # Mish
    h2 = jnp.dot(h1, w2t_ref[...], preferred_element_type=jnp.float32)   # (B, K)
    h2 = _groupnorm1(h2, g2_ref[...], b2_ref[...])
    att = jax.nn.sigmoid(h2)                                              # (B, K)

    # ---- ADFC: all K expert 1x1 convs in ONE MXU matmul, mixed by att ----
    z = jnp.dot(y, adfc_wt_ref[...],
                preferred_element_type=jnp.float32) + adfc_b_ref[...]     # (B, K*Oh)
    adfc = att[:, 0:1] * z[:, 0:oh]
    for k in range(1, n_experts):                                         # static K (=4)
        adfc = adfc + att[:, k:k + 1] * z[:, k * oh:(k + 1) * oh]
    adfc = jnp.maximum(adfc, 0.0)                                         # ReLU

    # ---- Conv2d(Oh, Cout, 1) + Sigmoid -> channel gate ----
    o2 = jnp.dot(adfc, w3t_ref[...], preferred_element_type=jnp.float32) + b3_ref[...]
    gate_ref[...] = jax.nn.sigmoid(o2).astype(gate_ref.dtype)             # (B, Cout)


# ---------------------------------------------------------------------------
# Pass 3: out = gate * x (lane-dense load-mul-store; both grid axes parallel).
# ---------------------------------------------------------------------------
def _apply_gate_kernel(gate_ref, x_ref, out_ref):
    out_ref[...] = (x_ref[...].astype(jnp.float32) * gate_ref[...]).astype(out_ref.dtype)


def _full_block(shape):
    nd = len(shape)
    return pl.BlockSpec(shape, lambda i, _nd=nd: (0,) * _nd)


def adfc_forward(x, m, p, *, compute_dtype=None, alias_x=False):
    """x: (B, Cout, H, W); m: (B, Cin, Hm, Wm); returns gate(m) * x, shape of x."""
    b, cout, h, w = x.shape
    bm, cin, hm, wm = m.shape
    assert bm == b
    hw, hwm = h * w, hm * wm
    out_dtype = jnp.dtype(compute_dtype) if compute_dtype is not None else x.dtype

    vmem_cap = _vmem_capacity_bytes()
    vmem_limit = int(vmem_cap * 3 // 4)         # ~96 MiB on v5e/v6e, ~48 MiB on v7x
    pool_budget = vmem_limit // 3
    apply_budget = vmem_limit // 2

    # ------------------ pass 1: y = adaptive_avg_pool2d(m, 1) ------------------
    m3 = m.reshape(b, cin, hwm)                 # free contiguous view; NATIVE dtype
    m_bytes = jnp.dtype(m.dtype).itemsize
    tile_c = _LANE if (cin % _LANE == 0 and cin > _LANE) else cin
    if hwm % _LANE == 0:
        cap_s = max(_LANE, (pool_budget // max(1, 2 * b * tile_c * m_bytes)) // _LANE * _LANE)
        tile_s = _choose_divisor_tile(hwm, _LANE, cap_s)
    else:
        tile_s = hwm                            # full lanes; channel axis still tiled
    grid_c = cin // tile_c
    grid_s = hwm // tile_s
    assert tile_s % _LANE == 0 or grid_s == 1

    y = pl.pallas_call(
        functools.partial(_pool_kernel, inv_hwm=1.0 / float(hwm)),
        out_shape=jax.ShapeDtypeStruct((b, cin), jnp.float32),
        grid_spec=pltpu.PrefetchScalarGridSpec(
            num_scalar_prefetch=0,
            grid=(grid_c, grid_s),
            in_specs=[pl.BlockSpec((b, tile_c, tile_s), lambda ci, si: (0, ci, si))],
            out_specs=pl.BlockSpec((b, tile_c), lambda ci, si: (0, ci)),
            scratch_shapes=[pltpu.VMEM((b, tile_c, _LANE), jnp.float32)],
        ),
        compiler_params=pltpu.CompilerParams(
            dimension_semantics=("parallel", "arbitrary"),   # channel tiles shard across TCs
            vmem_limit_bytes=vmem_limit,
        ),
        cost_estimate=pl.CostEstimate(
            flops=b * cin * hwm, transcendentals=0,
            bytes_accessed=b * cin * hwm * m_bytes + b * cin * 4),
    )(m3)

    # ------------------ pass 2: channel gate (tiny, single program) ------------
    K, oh, _cin2 = p["adfc_w"].shape
    w1t = p["se_w1"].T.astype(jnp.float32)                              # (Cin, Cr)
    g1 = p["se_g1"].reshape(1, -1).astype(jnp.float32)
    b1 = p["se_b1"].reshape(1, -1).astype(jnp.float32)
    w2t = p["se_w2"].T.astype(jnp.float32)                              # (Cr, K)
    g2 = p["se_g2"].reshape(1, -1).astype(jnp.float32)
    b2 = p["se_b2"].reshape(1, -1).astype(jnp.float32)
    # experts fused: (K, Oh, Cin) -> (Cin, K*Oh), column block k == W_k^T
    adfc_wt = jnp.transpose(p["adfc_w"], (2, 0, 1)).reshape(cin, K * oh).astype(jnp.float32)
    adfc_bf = p["adfc_b"].reshape(1, K * oh).astype(jnp.float32)
    w3t = p["conv_w"].T.astype(jnp.float32)                             # (Oh, Cout)
    b3 = p["conv_b"].reshape(1, -1).astype(jnp.float32)
    gate_inputs = (y, w1t, g1, b1, w2t, g2, b2, adfc_wt, adfc_bf, w3t, b3)

    gate = pl.pallas_call(
        functools.partial(_gate_kernel, n_experts=int(K), oh=int(oh)),
        out_shape=jax.ShapeDtypeStruct((b, cout), jnp.float32),
        grid_spec=pltpu.PrefetchScalarGridSpec(
            num_scalar_prefetch=0,
            grid=(1,),
            in_specs=[_full_block(a.shape) for a in gate_inputs],
            out_specs=_full_block((b, cout)),
        ),
        compiler_params=pltpu.CompilerParams(
            dimension_semantics=("arbitrary",),
            vmem_limit_bytes=vmem_limit,
        ),
    )(*gate_inputs)

    # ------------------ pass 3: out = gate * x (lane-dense tiles) --------------
    nrows = b * cout
    x2 = x.reshape(nrows, hw)                   # free contiguous view; NATIVE dtype
    gate2 = gate.reshape(nrows, 1)
    xb = jnp.dtype(x.dtype).itemsize
    ob = jnp.dtype(out_dtype).itemsize
    if hw % _LANE == 0:
        row_tile = _choose_divisor_tile(nrows, _SUBLANE, 256)
        cap_col = max(_LANE, (apply_budget // max(1, 2 * row_tile * (xb + ob))) // _LANE * _LANE)
        col_tile = _choose_divisor_tile(hw, _LANE, cap_col)
    else:
        col_tile = hw                           # keep full lanes; tile rows instead
        cap_row = max(_SUBLANE,
                      (apply_budget // max(1, 2 * hw * (xb + ob))) // _SUBLANE * _SUBLANE)
        row_tile = _choose_divisor_tile(nrows, _SUBLANE, cap_row)
    grid_r = nrows // row_tile
    grid_col = hw // col_tile

    extra = {}
    if alias_x and jnp.dtype(x.dtype) == out_dtype:
        extra["input_output_aliases"] = {1: 0}  # out aliases x (opt-in)

    out2 = pl.pallas_call(
        _apply_gate_kernel,
        out_shape=jax.ShapeDtypeStruct((nrows, hw), out_dtype),
        grid_spec=pltpu.PrefetchScalarGridSpec(
            num_scalar_prefetch=0,
            grid=(grid_r, grid_col),
            in_specs=[
                pl.BlockSpec((row_tile, 1), lambda i, j: (i, 0)),         # gate: resident over j
                pl.BlockSpec((row_tile, col_tile), lambda i, j: (i, j)),  # x tile (native dtype)
            ],
            out_specs=pl.BlockSpec((row_tile, col_tile), lambda i, j: (i, j)),
        ),
        compiler_params=pltpu.CompilerParams(
            dimension_semantics=("parallel", "parallel"),  # both axes shardable (v7x 2-TC)
            vmem_limit_bytes=vmem_limit,
        ),
        cost_estimate=pl.CostEstimate(
            flops=nrows * hw, transcendentals=0,
            bytes_accessed=nrows * hw * (xb + ob) + nrows * 4),
        **extra,
    )(gate2, x2)
    return out2.reshape(b, cout, h, w)


def init_params(key, in_planes, out_planes, reduction=16, K=4, se_reduction=16):
    """Deterministic synthetic init matching the module's parameter shapes."""
    cr = in_planes // se_reduction           # SE hidden
    oh = out_planes // reduction             # ADFC out_planes
    ks = jax.random.split(key, 6)
    p = {
        # SqueezeAndExcitation: Conv2d(Cin, Cr, 1, bias=False), GN, Mish, Conv2d(Cr, K, 1, bias=False), GN
        "se_w1": jax.random.normal(ks[0], (cr, in_planes), jnp.float32) / np.sqrt(in_planes),
        "se_g1": jnp.ones((cr,), jnp.float32),
        "se_b1": jnp.zeros((cr,), jnp.float32),
        "se_w2": jax.random.normal(ks[1], (K, cr), jnp.float32) / np.sqrt(cr),
        "se_g2": jnp.ones((K,), jnp.float32),
        "se_b2": jnp.zeros((K,), jnp.float32),
        # ADFC: weight (K, Oh, Cin, 1, 1) -> (K, Oh, Cin), bias (K, Oh)
        "adfc_w": jax.random.normal(ks[2], (K, oh, in_planes), jnp.float32) / np.sqrt(in_planes),
        "adfc_b": jax.random.normal(ks[3], (K, oh), jnp.float32) * 0.1,
        # Conv2d(Oh, Cout, 1) with bias
        "conv_w": jax.random.normal(ks[4], (out_planes, oh), jnp.float32) / np.sqrt(oh),
        "conv_b": jax.random.normal(ks[5], (out_planes,), jnp.float32) * 0.1,
    }
    return p


def adfc_ref(x, m, p):
    """Pure-JAX reference mirroring the PyTorch forward exactly."""
    b = x.shape[0]
    y = jnp.mean(m, axis=(2, 3))                              # adaptive_avg_pool2d(m, 1)
    h1 = y @ p["se_w1"].T
    h1 = _groupnorm1(h1, p["se_g1"][None, :], p["se_b1"][None, :])
    h1 = h1 * jnp.tanh(_softplus(h1))
    h2 = h1 @ p["se_w2"].T
    h2 = _groupnorm1(h2, p["se_g2"][None, :], p["se_b2"][None, :])
    att = jnp.asarray(jax.nn.sigmoid(h2))                     # (b, K)
    K, Oh, Cin = p["adfc_w"].shape
    agg_w = (att @ p["adfc_w"].reshape(K, -1)).reshape(b, Oh, Cin)
    agg_b = att @ p["adfc_b"]
    adfc = jnp.einsum("boc,bc->bo", agg_w, y) + agg_b         # grouped 1x1 conv on pooled y
    adfc = jnp.maximum(adfc, 0.0)
    o2 = adfc @ p["conv_w"].T + p["conv_b"][None, :]
    gate = jax.nn.sigmoid(o2)
    return gate[:, :, None, None] * x


if __name__ == "__main__":
    key = jax.random.PRNGKey(0)
    k_x, k_m, k_p = jax.random.split(key, 3)
    # H*W = 256 (2x128) -> lane-dense tiles; Cin, Cout >= 16 (reductions of 16)
    B, Cin, Cout, H, W = 2, 32, 32, 16, 16
    x = jax.random.normal(k_x, (B, Cout, H, W), jnp.float32)
    m = jax.random.normal(k_m, (B, Cin, H, W), jnp.float32)
    params = init_params(k_p, Cin, Cout)

    out = jax.block_until_ready(adfc_forward(x, m, params))
    ref = adfc_ref(x, m, params)
    assert out.shape == (B, Cout, H, W)
    np.testing.assert_allclose(np.asarray(out), np.asarray(ref), rtol=1e-4, atol=1e-5)

    # bf16 output path (no wrapper-side casts; store dtype handled inside the kernel)
    out_bf16 = jax.block_until_ready(adfc_forward(x, m, params, compute_dtype=jnp.bfloat16))
    np.testing.assert_allclose(np.asarray(out_bf16, dtype=np.float32), np.asarray(ref),
                               rtol=4e-2, atol=4e-2)

    print("KERNEL_OK")
</pallas_src>

<mosaic_0001>
module attributes {stable_mosaic.version = 11 : i64} {
  func.func @_pool_kernel(%arg0: i32, %arg1: i32, %arg2: memref<2x32x256xf32, #tpu.memory_space<vmem>>, %arg3: memref<2x32xf32, #tpu.memory_space<vmem>>, %arg4: memref<2x32x128xf32, #tpu.memory_space<vmem>>) attributes {dimension_semantics = [#tpu.dimension_semantics<parallel>, #tpu.dimension_semantics<arbitrary>], iteration_bounds = array<i64: 1, 1>, scalar_prefetch = 0 : i64, scratch_operands = 1 : i64, tpu.core_type = #tpu.core_type<tc>, window_params = [{transform_indices = @transform_0, window_bounds = array<i64: 2, 32, 256>}, {transform_indices = @transform_1, window_bounds = array<i64: 2, 32>}]} {
    %c0_i32 = arith.constant 0 : i32
    %0 = arith.cmpi eq, %arg1, %c0_i32 : i32
    %1 = arith.extui %0 : i1 to i32
    %c0_i32_0 = arith.constant 0 : i32
    %2 = arith.cmpi ne, %1, %c0_i32_0 : i32
    scf.if %2 {
      %cst = arith.constant 0.000000e+00 : f32
      %14 = vector.broadcast %cst : f32 to vector<2x32x128xf32>
      %c0_19 = arith.constant 0 : index
      %c0_20 = arith.constant 0 : index
      %c0_21 = arith.constant 0 : index
      %15 = vector.load %arg4[%c0_19, %c0_20, %c0_21] : memref<2x32x128xf32, #tpu.memory_space<vmem>>, vector<2x32x128xf32>
      tpu.vector_store %arg4[%c0_19, %c0_20, %c0_21], %14 {strides = array<i32>} : memref<2x32x128xf32, #tpu.memory_space<vmem>>, vector<2x32x128xf32>,
    } else {
    }
    %c0 = arith.constant 0 : index
    %c0_1 = arith.constant 0 : index
    %c0_2 = arith.constant 0 : index
    %3 = vector.load %arg4[%c0, %c0_1, %c0_2] : memref<2x32x128xf32, #tpu.memory_space<vmem>>, vector<2x32x128xf32>
    %c0_3 = arith.constant 0 : index
    %c0_4 = arith.constant 0 : index
    %c0_5 = arith.constant 0 : index
    %4 = vector.load %arg2[%c0_3, %c0_4, %c0_5] : memref<2x32x256xf32, #tpu.memory_space<vmem>>, vector<2x32x128xf32>
    %5 = arith.addf %3, %4 : vector<2x32x128xf32>
    %c0_6 = arith.constant 0 : index
    %c0_7 = arith.constant 0 : index
    %c0_8 = arith.constant 0 : index
    %6 = vector.load %arg4[%c0_6, %c0_7, %c0_8] : memref<2x32x128xf32, #tpu.memory_space<vmem>>, vector<2x32x128xf32>
    tpu.vector_store %arg4[%c0_6, %c0_7, %c0_8], %5 {strides = array<i32>} : memref<2x32x128xf32, #tpu.memory_space<vmem>>, vector<2x32x128xf32>,
    %c0_9 = arith.constant 0 : index
    %c0_10 = arith.constant 0 : index
    %c0_11 = arith.constant 0 : index
    %7 = vector.load %arg4[%c0_9, %c0_10, %c0_11] : memref<2x32x128xf32, #tpu.memory_space<vmem>>, vector<2x32x128xf32>
    %c0_12 = arith.constant 0 : index
    %c0_13 = arith.constant 0 : index
    %c128 = arith.constant 128 : index
    %8 = vector.load %arg2[%c0_12, %c0_13, %c128] : memref<2x32x256xf32, #tpu.memory_space<vmem>>, vector<2x32x128xf32>
    %9 = arith.addf %7, %8 : vector<2x32x128xf32>
    %c0_14 = arith.constant 0 : index
    %c0_15 = arith.constant 0 : index
    %c0_16 = arith.constant 0 : index
    %10 = vector.load %arg4[%c0_14, %c0_15, %c0_16] : memref<2x32x128xf32, #tpu.memory_space<vmem>>, vector<2x32x128xf32>
    tpu.vector_store %arg4[%c0_14, %c0_15, %c0_16], %9 {strides = array<i32>} : memref<2x32x128xf32, #tpu.memory_space<vmem>>, vector<2x32x128xf32>,
    %c0_i32_17 = arith.constant 0 : i32
    %11 = arith.cmpi eq, %arg1, %c0_i32_17 : i32
    %12 = arith.extui %11 : i1 to i32
    %c0_i32_18 = arith.constant 0 : i32
    %13 = arith.cmpi ne, %12, %c0_i32_18 : i32
    scf.if %13 {
      %c0_19 = arith.constant 0 : index
      %c0_20 = arith.constant 0 : index
      %c0_21 = arith.constant 0 : index
      %14 = vector.load %arg4[%c0_19, %c0_20, %c0_21] : memref<2x32x128xf32, #tpu.memory_space<vmem>>, vector<2x32x128xf32>
      %cst = arith.constant dense<0.000000e+00> : vector<2x32xf32>
      %15 = vector.multi_reduction <add>, %14, %cst [2] : vector<2x32x128xf32> to vector<2x32xf32>
      %cst_22 = arith.constant 3.906250e-03 : f32
      %16 = vector.broadcast %cst_22 : f32 to vector<2x32xf32>
      %17 = arith.mulf %15, %16 : vector<2x32xf32>
      %c0_23 = arith.constant 0 : index
      %c0_24 = arith.constant 0 : index
      %18 = vector.load %arg3[%c0_23, %c0_24] : memref<2x32xf32, #tpu.memory_space<vmem>>, vector<2x32xf32>
      tpu.vector_store %arg3[%c0_23, %c0_24], %17 {strides = array<i32>} : memref<2x32xf32, #tpu.memory_space<vmem>>, vector<2x32xf32>,
    } else {
    }
    return
  }
  func.func @transform_0(%arg0: i32, %arg1: i32) -> (i32, i32, i32) {
    %c0_i32 = arith.constant 0 : i32
    %c0_i32_0 = arith.constant 0 : i32
    return %c0_i32, %arg0, %arg1 : i32, i32, i32
  }
  func.func @transform_1(%arg0: i32, %arg1: i32) -> (i32, i32) {
    %c0_i32 = arith.constant 0 : i32
    %c0_i32_0 = arith.constant 0 : i32
    return %c0_i32, %arg0 : i32, i32
  }
}

</mosaic_0001>

<llo_original>
// kernel: tpu_custom_call.1
$region0: #{tpu_custom_call.1}
  #allocation0 [shape = 'u32[]', space=smem, size = 0x4, offset = 0x4, fixed_abs, tag = 'smem constant byte address 0x4 - core index']
  #allocation1 [shape = 'u32[144,128]{1,0:T(1,128)}', space=vmem, size = 0x12000, scoped, tag = 'internal scratch']
  #allocation2 [shape = 'f32[2,32,128]{2,1,0:T(8,128)}', space=vmem, size = 0x8000, scoped, tag = 'scratch operand']
  %s0 = inlined_call_operand.hbm [shape: f32[2,32,256], index: 0, kind: input, shape index: {}]
  %s1 = inlined_call_operand.hbm [shape: f32[2,32], index: 1, kind: output, shape index: {}]
  %s2 = sld [smem:[#allocation0]]
  $region26: #{tpu_custom_call.1} parent=0
    _
  %s4 = ssub.s32 1, %s2
  %s5 = scalar_select 0, %s4, %s2
  $region1: #{tpu_custom_call.1} parent=0
    #allocation3 [shape = 'u8[65536]{0}', space=vmem, size = 0x10000, scoped, tag = 'input window, operand 0, single buffered']
    #allocation4 [shape = 's32[1]{0}', space=sflag, size = 0x4, scoped, tag = 'scoped memory for tpu_custom_call.1']
    #allocation5 [shape = 's32[1]{0}', space=sflag, size = 0x4, scoped, tag = 'scoped memory for tpu_custom_call.1']
    #allocation6 [shape = 'u8[1024]{0}', space=vmem, size = 0x400, scoped, tag = 'output window, operand 0, single buffered']
    %6 = vsyncpa [#allocation4], 0
    %7 = vsyncpa [#allocation5], 0
    // Predicated region
    $region2: #{tpu_custom_call.1} parent=1 // pred_check
      _
    $region3: #{tpu_custom_call.1} parent=1 // pred_check_branch
      %9 = sbr.rel (0) target = $region5
    $region4: #{tpu_custom_call.1} parent=1 // pred_region
      %s11 = ssub.s32 2048, 2048
      %12 = vsyncadd [#allocation4], %s11
      %s13 = sshll.u32 [#allocation3], 4
      %s14 = int_to_ptr.vmem [resolvable:$true] %s13
      %19 = dma.hbm_to_vmem [thread:$0]  %s0, 2048, %s14, [#allocation4], 256, 256, 16
    $region5: #{tpu_custom_call.1} parent=1 // pred_fallthru
      _
    // Predicated region
    $region6: #{tpu_custom_call.1} parent=1 // pred_check
      _
    $region7: #{tpu_custom_call.1} parent=1 // pred_check_branch
      %21 = sbr.rel (0) target = $region9
    $region8: #{tpu_custom_call.1} parent=1 // pred_region
      %22 = dma.done [#allocation4], 2048
    $region9: #{tpu_custom_call.1} parent=1 // pred_fallthru
      _
    %p23 = scmp.eq.s32.totalorder 0, 0
    // Predicated region
    $region10: #{tpu_custom_call.1} parent=1 // pred_check
      %p24 = pneg %p23
    $region11: #{tpu_custom_call.1} parent=1 // pred_check_branch
      %26 = sbr.rel (%p24) target = $region13
    $region12: #{tpu_custom_call.1} parent=1 // pred_region
      %27 = vst [vmem:[#allocation2] sm:$0xff] 0.0
      %28 = vst [vmem:[#allocation2 + $0x8] sm:$0xff] 0.0
      %29 = vst [vmem:[#allocation2 + $0x10] sm:$0xff] 0.0
      %30 = vst [vmem:[#allocation2 + $0x18] sm:$0xff] 0.0
      %31 = vst [vmem:[#allocation2 + $0x20] sm:$0xff] 0.0
      %32 = vst [vmem:[#allocation2 + $0x28] sm:$0xff] 0.0
      %33 = vst [vmem:[#allocation2 + $0x30] sm:$0xff] 0.0
      %34 = vst [vmem:[#allocation2 + $0x38] sm:$0xff] 0.0
    $region13: #{tpu_custom_call.1} parent=1 // pred_fallthru
      _
    %v35 = vld [vmem:[#allocation2] sm:$0xff]
    %v36 = vld [vmem:[#allocation2 + $0x8] sm:$0xff]
    %v37 = vld [vmem:[#allocation2 + $0x10] sm:$0xff]
    %v38 = vld [vmem:[#allocation2 + $0x18] sm:$0xff]
    %v39 = vld [vmem:[#allocation2 + $0x20] sm:$0xff]
    %v40 = vld [vmem:[#allocation2 + $0x28] sm:$0xff]
    %v41 = vld [vmem:[#allocation2 + $0x30] sm:$0xff]
    %v42 = vld [vmem:[#allocation2 + $0x38] sm:$0xff]
    %v43 = vld [vmem:[#allocation3] sm:$0xff]
    %v44 = vld [vmem:[#allocation3 + $0x10] sm:$0xff]
    %v45 = vld [vmem:[#allocation3 + $0x20] sm:$0xff]
    %v46 = vld [vmem:[#allocation3 + $0x30] sm:$0xff]
    %v47 = vld [vmem:[#allocation3 + $0x40] sm:$0xff]
    %v48 = vld [vmem:[#allocation3 + $0x50] sm:$0xff]
    %v49 = vld [vmem:[#allocation3 + $0x60] sm:$0xff]
    %v50 = vld [vmem:[#allocation3 + $0x70] sm:$0xff]
    %v51 = vadd.f32 %v35, %v43
    %v52 = vadd.f32 %v36, %v44
    %v53 = vadd.f32 %v37, %v45
    %v54 = vadd.f32 %v38, %v46
    %v55 = vadd.f32 %v39, %v47
    %v56 = vadd.f32 %v40, %v48
    %v57 = vadd.f32 %v41, %v49
    %v58 = vadd.f32 %v42, %v50
    %59 = vst [vmem:[#allocation2] sm:$0xff] %v51
    %60 = vst [vmem:[#allocation2 + $0x8] sm:$0xff] %v52
    %61 = vst [vmem:[#allocation2 + $0x10] sm:$0xff] %v53
    %62 = vst [vmem:[#allocation2 + $0x18] sm:$0xff] %v54
    %63 = vst [vmem:[#allocation2 + $0x20] sm:$0xff] %v55
    %64 = vst [vmem:[#allocation2 + $0x28] sm:$0xff] %v56
    %65 = vst [vmem:[#allocation2 + $0x30] sm:$0xff] %v57
    %66 = vst [vmem:[#allocation2 + $0x38] sm:$0xff] %v58
    %v67 = vld [vmem:[#allocation2] sm:$0xff]
    %v68 = vld [vmem:[#allocation2 + $0x8] sm:$0xff]
    %v69 = vld [vmem:[#allocation2 + $0x10] sm:$0xff]
    %v70 = vld [vmem:[#allocation2 + $0x18] sm:$0xff]
    %v71 = vld [vmem:[#allocation2 + $0x20] sm:$0xff]
    %v72 = vld [vmem:[#allocation2 + $0x28] sm:$0xff]
    %v73 = vld [vmem:[#allocation2 + $0x30] sm:$0xff]
    %v74 = vld [vmem:[#allocation2 + $0x38] sm:$0xff]
    %v75 = vld [vmem:[#allocation3 + $0x8] sm:$0xff]
    %v76 = vld [vmem:[#allocation3 + $0x18] sm:$0xff]
    %v77 = vld [vmem:[#allocation3 + $0x28] sm:$0xff]
    %v78 = vld [vmem:[#allocation3 + $0x38] sm:$0xff]
    %v79 = vld [vmem:[#allocation3 + $0x48] sm:$0xff]
    %v80 = vld [vmem:[#allocation3 + $0x58] sm:$0xff]
    %v81 = vld [vmem:[#allocation3 + $0x68] sm:$0xff]
    %v82 = vld [vmem:[#allocation3 + $0x78] sm:$0xff]
    %v83 = vadd.f32 %v67, %v75
    %v84 = vadd.f32 %v68, %v76
    %v85 = vadd.f32 %v69, %v77
    %v86 = vadd.f32 %v70, %v78
    %v87 = vadd.f32 %v71, %v79
    %v88 = vadd.f32 %v72, %v80
    %v89 = vadd.f32 %v73, %v81
    %v90 = vadd.f32 %v74, %v82
    %91 = vst [vmem:[#allocation2] sm:$0xff] %v83
    %92 = vst [vmem:[#allocation2 + $0x8] sm:$0xff] %v84
    %93 = vst [vmem:[#allocation2 + $0x10] sm:$0xff] %v85
    %94 = vst [vmem:[#allocation2 + $0x18] sm:$0xff] %v86
    %95 = vst [vmem:[#allocation2 + $0x20] sm:$0xff] %v87
    %96 = vst [vmem:[#allocation2 + $0x28] sm:$0xff] %v88
    %97 = vst [vmem:[#allocation2 + $0x30] sm:$0xff] %v89
    %98 = vst [vmem:[#allocation2 + $0x38] sm:$0xff] %v90
    // Predicated region
    $region14: #{tpu_custom_call.1} parent=1 // pred_check
      %p99 = pneg %p23
    $region15: #{tpu_custom_call.1} parent=1 // pred_check_branch
      %101 = sbr.rel (%p99) target = $region17
    $region16: #{tpu_custom_call.1} parent=1 // pred_region
      %v102 = vld [vmem:[#allocation2] sm:$0xff]
      %v103 = vld [vmem:[#allocation2 + $0x8] sm:$0xff]
      %v104 = vld [vmem:[#allocation2 + $0x10] sm:$0xff]
      %v105 = vld [vmem:[#allocation2 + $0x18] sm:$0xff]
      %v106 = vld [vmem:[#allocation2 + $0x20] sm:$0xff]
      %v107 = vld [vmem:[#allocation2 + $0x28] sm:$0xff]
      %v108 = vld [vmem:[#allocation2 + $0x30] sm:$0xff]
      %v109 = vld [vmem:[#allocation2 + $0x38] sm:$0xff]
      %110 = vadd.xlane.f32.xlu0 %v102
      %v111 = vpop.xlane.xlu0 %110
      %112 = vadd.xlane.f32.xlu0 %v103
      %v113 = vpop.xlane.xlu0 %112
      %114 = vadd.xlane.f32.xlu0 %v104
      %v115 = vpop.xlane.xlu0 %114
      %116 = vadd.xlane.f32.xlu0 %v105
      %v117 = vpop.xlane.xlu0 %116
      %118 = vadd.xlane.f32.xlu0 %v106
      %v119 = vpop.xlane.xlu0 %118
      %120 = vadd.xlane.f32.xlu0 %v107
      %v121 = vpop.xlane.xlu0 %120
      %122 = vadd.xlane.f32.xlu0 %v108
      %v123 = vpop.xlane.xlu0 %122
      %124 = vadd.xlane.f32.xlu0 %v109
      %v125 = vpop.xlane.xlu0 %124
      %v126 = vmul.f32 %v111, 0.00390625
      %v127 = vmul.f32 %v113, 0.00390625
      %v128 = vmul.f32 %v115, 0.00390625
      %v129 = vmul.f32 %v117, 0.00390625
      %v130 = vmul.f32 %v119, 0.00390625
      %v131 = vmul.f32 %v121, 0.00390625
      %v132 = vmul.f32 %v123, 0.00390625
      %v133 = vmul.f32 %v125, 0.00390625
      %v142 = vlaneseq
      %v143 = vand.u32 %v142, 127
      %v144 = vlaneseq
      %v145 = vshrl.u32 %v144, 7
      %v146 = vsub.s32 %v143, %v145
      %v147 = vrot.slane %v126, %v146
      %v148 = vadd.s32 %v143, 4294967288
      %v149 = vlaneseq
      %v150 = vshrl.u32 %v149, 7
      %v151 = vsub.s32 %v148, %v150
      %v152 = vrot.slane %v127, %v151
      %vm153 = vcmask 130112
      %v154 = vsel %vm153, %v152, %v147
      %v155 = vadd.s32 %v143, 4294967280
      %v156 = vlaneseq
      %v157 = vshrl.u32 %v156, 7
      %v158 = vsub.s32 %v155, %v157
      %v159 = vrot.slane %v128, %v158
      %vm160 = vcmask 195712
      %v161 = vsel %vm160, %v159, %v154
      %v162 = vadd.s32 %v143, 4294967272
      %v163 = vlaneseq
      %v164 = vshrl.u32 %v163, 7
      %v165 = vsub.s32 %v162, %v164
      %v166 = vrot.slane %v129, %v165
      %vm167 = vcmask 261312
      %v168 = vsel %vm167, %v166, %v161
      %v169 = vlaneseq
      %v170 = vshrl.u32 %v169, 7
      %v171 = vsub.s32 %v143, %v170
      %v172 = vrot.slane %v130, %v171
      %v173 = vlaneseq
      %v174 = vshrl.u32 %v173, 7
      %v175 = vsub.s32 %v148, %v174
      %v176 = vrot.slane %v131, %v175
      %v177 = vsel %vm153, %v176, %v172
      %v178 = vlaneseq
      %v179 = vshrl.u32 %v178, 7
      %v180 = vsub.s32 %v155, %v179
      %v181 = vrot.slane %v132, %v180
      %v182 = vsel %vm160, %v181, %v177
      %v183 = vlaneseq
      %v184 = vshrl.u32 %v183, 7
      %v185 = vsub.s32 %v162, %v184
      %v186 = vrot.slane %v133, %v185
      %v187 = vsel %vm167, %v186, %v182
      %vm188 = vcmask 1041409
      %v189 = vsel %vm188, %v187, %v168
      %vm191 = vcmask 254976
      %192 = vst.msk [vmem:[#allocation6] sm:$0x3] %vm191, %v189
    $region17: #{tpu_custom_call.1} parent=1 // pred_fallthru
      _
    // Predicated region
    $region18: #{tpu_custom_call.1} parent=1 // pred_check
      _
    $region19: #{tpu_custom_call.1} parent=1 // pred_check_branch
      %194 = sbr.rel (0) target = $region21
    $region20: #{tpu_custom_call.1} parent=1 // pred_region
      %s196 = ssub.s32 32, 32
      %197 = vsyncadd [#allocation5], %s196
      %s199 = sshll.u32 [#allocation6], 4
      %s200 = int_to_ptr.vmem [resolvable:$true] %s199
      %202 = dma.vmem_to_hbm [thread:$0]  %s200, 32, %s1, [#allocation5]
    $region21: #{tpu_custom_call.1} parent=1 // pred_fallthru
      _
    // Predicated region
    $region22: #{tpu_custom_call.1} parent=1 // pred_check
      _
    $region23: #{tpu_custom_call.1} parent=1 // pred_check_branch
      %204 = sbr.rel (0) target = $region25
    $region24: #{tpu_custom_call.1} parent=1 // pred_region
      %205 = dma.done [#allocation5], 32
    $region25: #{tpu_custom_call.1} parent=1 // pred_fallthru
      _
    %206 = vsyncpa [#allocation4], 1
    %207 = vsyncpa [#allocation5], 1

</llo_original>
